<compile_context>
chip_gen: v7x
topology: tpu7x:2x2x1
jax: 0.10.0
libtpu: 0.0.40
codegen_flags: <defaults>
</compile_context>

<pallas_src>
import jax
import jax.numpy as jnp
from jax.experimental import pallas as pl
from jax.experimental.pallas import tpu as pltpu

N_STATES = 1
N_HIDDEN = 50
N_ACTIONS = 2
_PACK_W = N_HIDDEN + 1  # hidden width + 1 bias row


def _net_kernel(x_ref, p_ref, q_ref):
    # x_ref: (1, tb)   p_ref: (51, 4)   q_ref: (N_ACTIONS, tb)
    #   p_ref col 0: [w1 row  | 0    ]
    #   p_ref col 1: [b1      | 1    ]  -> hidden row 50 is always relu(1) = 1
    #   p_ref col 2: [w2[:,0] | b2[0]]
    #   p_ref col 3: [w2[:,1] | b2[1]]
    x = x_ref[...]                                             # (1, tb)
    w1 = p_ref[:, 0:1]                                         # (51, 1)
    b1 = p_ref[:, 1:2]                                         # (51, 1)
    # Layer 1 (K = N_STATES = 1): VPU broadcast multiply-add + ReLU.
    h = jnp.maximum(x * w1 + b1, 0.0)                          # (51, tb)
    # Layer 2: per-action VPU multiply + XLU sublane reduction (bias folded
    # in via the always-1 bias row), written as two lane-dense output rows.
    q0 = jnp.sum(h * p_ref[:, 2:3], axis=0, keepdims=True)     # (1, tb)
    q1 = jnp.sum(h * p_ref[:, 3:4], axis=0, keepdims=True)     # (1, tb)
    q_ref[0:1, :] = q0
    q_ref[1:2, :] = q1


def _net_greedy_kernel(x_ref, p_ref, q_ref, a_ref):
    # Same as _net_kernel, plus fused greedy action selection (argmax over the
    # two Q-values = one VPU compare), avoiding a second XLA op + readback on
    # the latency-critical inference path.
    x = x_ref[...]
    h = jnp.maximum(x * p_ref[:, 0:1] + p_ref[:, 1:2], 0.0)
    q0 = jnp.sum(h * p_ref[:, 2:3], axis=0, keepdims=True)
    q1 = jnp.sum(h * p_ref[:, 3:4], axis=0, keepdims=True)
    q_ref[0:1, :] = q0
    q_ref[1:2, :] = q1
    # Ties -> action 0, matching torch.argmax's first-max convention.
    a_ref[...] = (q1 > q0).astype(jnp.int32)                   # (1, tb)


def _pick_batch_tile(B):
    # Lane-axis tiles must be multiples of 128 (or the full batch).  Cap at 512
    # so the (51, tb) hidden tile stays comfortably inside the 64-vreg file.
    # Prefer >= 2 grid steps so the "parallel" batch axis can shard across the
    # two TensorCores on v7x (neutral on single-TC v5e/v6e).
    for tb in (512, 256, 128):
        if B % tb == 0 and B // tb >= 2:
            return tb
    if B % 512 == 0:
        return 512
    return B  # small / odd batch: single full block


def _cost_estimate(B, with_argmax=False):
    flops = 6 * B * _PACK_W + (2 * B if with_argmax else 0)
    bytes_accessed = (B * N_STATES * 4            # x
                      + _PACK_W * 4 * 4           # packed params
                      + B * N_ACTIONS * 4         # q-values
                      + (B * 4 if with_argmax else 0))
    return pl.CostEstimate(flops=flops, transcendentals=0,
                           bytes_accessed=bytes_accessed)


def net_forward(x, packed):
    """x: (B, N_STATES) f32, packed: (51, 4) f32 -> Q-values (B, N_ACTIONS)."""
    B = x.shape[0]
    tb = _pick_batch_tile(B)
    xt = x.reshape(1, B)  # free: N_STATES == 1, buffer already contiguous
    q_t = pl.pallas_call(
        _net_kernel,
        out_shape=jax.ShapeDtypeStruct((N_ACTIONS, B), jnp.float32),
        grid=(B // tb,),
        in_specs=[
            pl.BlockSpec((1, tb), lambda i: (0, i)),
            pl.BlockSpec((_PACK_W, 4), lambda i: (0, 0)),  # VMEM-resident params
        ],
        out_specs=pl.BlockSpec((N_ACTIONS, tb), lambda i: (0, i)),
        compiler_params=pltpu.CompilerParams(
            dimension_semantics=("parallel",)),
        cost_estimate=_cost_estimate(B),
    )(xt, packed)
    return q_t.T  # (B, N_ACTIONS), same semantics as the PyTorch module


def net_forward_greedy(x, packed):
    """Inference path: returns (Q-values (B, N_ACTIONS), greedy actions (B,))."""
    B = x.shape[0]
    tb = _pick_batch_tile(B)
    xt = x.reshape(1, B)
    q_t, act = pl.pallas_call(
        _net_greedy_kernel,
        out_shape=(jax.ShapeDtypeStruct((N_ACTIONS, B), jnp.float32),
                   jax.ShapeDtypeStruct((1, B), jnp.int32)),
        grid=(B // tb,),
        in_specs=[
            pl.BlockSpec((1, tb), lambda i: (0, i)),
            pl.BlockSpec((_PACK_W, 4), lambda i: (0, 0)),
        ],
        out_specs=(pl.BlockSpec((N_ACTIONS, tb), lambda i: (0, i)),
                   pl.BlockSpec((1, tb), lambda i: (0, i))),
        compiler_params=pltpu.CompilerParams(
            dimension_semantics=("parallel",)),
        cost_estimate=_cost_estimate(B, with_argmax=True),
    )(xt, packed)
    return q_t.T, act.reshape(B)


def pack_params(w1, b1, w2, b2):
    """w1: (1, 50) (= torch fc1.weight.T), b1: (50,),
       w2: (50, 2) (= torch out.weight.T), b2: (2,) -> packed (51, 4) f32.

    NOTE: the bias-row trick requires the hidden activation f to satisfy
    f(1) = 1 (true for ReLU).  If the activation ever changes (GELU/tanh/...),
    this packing silently produces wrong Q-values — update the kernel too.
    """
    p = jnp.zeros((_PACK_W, 4), jnp.float32)
    p = p.at[:N_HIDDEN, 0].set(w1[0])
    p = p.at[:N_HIDDEN, 1].set(b1)
    p = p.at[N_HIDDEN, 1].set(1.0)        # bias row for layer 2
    p = p.at[:N_HIDDEN, 2].set(w2[:, 0])
    p = p.at[N_HIDDEN, 2].set(b2[0])
    p = p.at[:N_HIDDEN, 3].set(w2[:, 1])
    p = p.at[N_HIDDEN, 3].set(b2[1])
    return p


def init_params(key):
    """Mirror the PyTorch module init: weights ~ N(0, 0.1); biases use the
    nn.Linear default U(-1/sqrt(fan_in), 1/sqrt(fan_in))."""
    k1, k2, k3, k4 = jax.random.split(key, 4)
    w1 = 0.1 * jax.random.normal(k1, (N_STATES, N_HIDDEN), jnp.float32)
    w2 = 0.1 * jax.random.normal(k2, (N_HIDDEN, N_ACTIONS), jnp.float32)
    b1 = jax.random.uniform(k3, (N_HIDDEN,), jnp.float32,
                            minval=-1.0 / jnp.sqrt(N_STATES),
                            maxval=1.0 / jnp.sqrt(N_STATES))
    b2 = jax.random.uniform(k4, (N_ACTIONS,), jnp.float32,
                            minval=-1.0 / jnp.sqrt(N_HIDDEN),
                            maxval=1.0 / jnp.sqrt(N_HIDDEN))
    return w1, b1, w2, b2


if __name__ == "__main__":
    key = jax.random.PRNGKey(0)
    kx, kp = jax.random.split(key)
    B = 8
    x = jax.random.normal(kx, (B, N_STATES), jnp.float32)
    w1, b1, w2, b2 = init_params(kp)
    packed = pack_params(w1, b1, w2, b2)   # pack once, reuse on every call

    out = jax.jit(net_forward)(x, packed)
    out = jax.block_until_ready(out)

    q_g, act = jax.jit(net_forward_greedy)(x, packed)
    q_g, act = jax.block_until_ready((q_g, act))

    # Pure-JAX reference: relu(x @ w1 + b1) @ w2 + b2
    ref = jnp.maximum(x @ w1 + b1[None, :], 0.0) @ w2 + b2[None, :]
    assert out.shape == (B, N_ACTIONS)
    assert jnp.allclose(out, ref, atol=1e-5, rtol=1e-5)
    assert jnp.allclose(q_g, ref, atol=1e-5, rtol=1e-5)
    assert jnp.array_equal(act, jnp.argmax(ref, axis=-1).astype(jnp.int32))

    # TODO(synk): optionally fold the epsilon-greedy compare (random action
    # override) into the greedy kernel via the stateful PRNG to remove one more
    # host-side op from the acting path.
    print("KERNEL_OK")
</pallas_src>

<mosaic_0001>
module attributes {stable_mosaic.version = 11 : i64} {
  func.func @_net_kernel(%arg0: i32, %arg1: memref<1x8xf32, #tpu.memory_space<vmem>>, %arg2: memref<51x4xf32, #tpu.memory_space<vmem>>, %arg3: memref<2x8xf32, #tpu.memory_space<vmem>>) attributes {dimension_semantics = [#tpu.dimension_semantics<parallel>], iteration_bounds = array<i64: 1>, scalar_prefetch = 0 : i64, scratch_operands = 0 : i64, tpu.core_type = #tpu.core_type<tc>, window_params = [{transform_indices = @transform_0, window_bounds = array<i64: 1, 8>}, {pipeline_mode = #tpu.pipeline_mode<synchronous>, transform_indices = @transform_1, window_bounds = array<i64: 51, 4>}, {transform_indices = @transform_2, window_bounds = array<i64: 2, 8>}]} {
    %c0 = arith.constant 0 : index
    %c0_0 = arith.constant 0 : index
    %0 = vector.load %arg1[%c0, %c0_0] : memref<1x8xf32, #tpu.memory_space<vmem>>, vector<1x8xf32>
    %c0_1 = arith.constant 0 : index
    %c0_2 = arith.constant 0 : index
    %1 = vector.load %arg2[%c0_1, %c0_2] : memref<51x4xf32, #tpu.memory_space<vmem>>, vector<51x1xf32>
    %c0_3 = arith.constant 0 : index
    %c1 = arith.constant 1 : index
    %2 = vector.load %arg2[%c0_3, %c1] : memref<51x4xf32, #tpu.memory_space<vmem>>, vector<51x1xf32>
    %3 = vector.broadcast %0 : vector<1x8xf32> to vector<51x8xf32>
    %4 = vector.broadcast %1 : vector<51x1xf32> to vector<51x8xf32>
    %5 = arith.mulf %3, %4 : vector<51x8xf32>
    %6 = vector.broadcast %2 : vector<51x1xf32> to vector<51x8xf32>
    %7 = arith.addf %5, %6 : vector<51x8xf32>
    %cst = arith.constant 0.000000e+00 : f32
    %8 = vector.broadcast %cst : f32 to vector<51x8xf32>
    %9 = arith.maximumf %7, %8 : vector<51x8xf32>
    %c0_4 = arith.constant 0 : index
    %c2 = arith.constant 2 : index
    %10 = vector.load %arg2[%c0_4, %c2] : memref<51x4xf32, #tpu.memory_space<vmem>>, vector<51x1xf32>
    %11 = vector.broadcast %10 : vector<51x1xf32> to vector<51x8xf32>
    %12 = arith.mulf %9, %11 : vector<51x8xf32>
    %cst_5 = arith.constant dense<0.000000e+00> : vector<8xf32>
    %13 = vector.multi_reduction <add>, %12, %cst_5 [0] : vector<51x8xf32> to vector<8xf32>
    %14 = vector.shape_cast %13 : vector<8xf32> to vector<1x8xf32>
    %c0_6 = arith.constant 0 : index
    %c3 = arith.constant 3 : index
    %15 = vector.load %arg2[%c0_6, %c3] : memref<51x4xf32, #tpu.memory_space<vmem>>, vector<51x1xf32>
    %16 = vector.broadcast %15 : vector<51x1xf32> to vector<51x8xf32>
    %17 = arith.mulf %9, %16 : vector<51x8xf32>
    %cst_7 = arith.constant dense<0.000000e+00> : vector<8xf32>
    %18 = vector.multi_reduction <add>, %17, %cst_7 [0] : vector<51x8xf32> to vector<8xf32>
    %19 = vector.shape_cast %18 : vector<8xf32> to vector<1x8xf32>
    %c0_8 = arith.constant 0 : index
    %c0_9 = arith.constant 0 : index
    %20 = vector.load %arg3[%c0_8, %c0_9] : memref<2x8xf32, #tpu.memory_space<vmem>>, vector<1x8xf32>
    tpu.vector_store %arg3[%c0_8, %c0_9], %14 {strides = array<i32>} : memref<2x8xf32, #tpu.memory_space<vmem>>, vector<1x8xf32>,
    %c1_10 = arith.constant 1 : index
    %c0_11 = arith.constant 0 : index
    %21 = vector.load %arg3[%c1_10, %c0_11] : memref<2x8xf32, #tpu.memory_space<vmem>>, vector<1x8xf32>
    tpu.vector_store %arg3[%c1_10, %c0_11], %19 {strides = array<i32>} : memref<2x8xf32, #tpu.memory_space<vmem>>, vector<1x8xf32>,
    return
  }
  func.func @transform_0(%arg0: i32) -> (i32, i32) {
    %c0_i32 = arith.constant 0 : i32
    %c0_i32_0 = arith.constant 0 : i32
    return %c0_i32, %arg0 : i32, i32
  }
  func.func @transform_1(%arg0: i32) -> (i32, i32) {
    %c0_i32 = arith.constant 0 : i32
    %c0_i32_0 = arith.constant 0 : i32
    %c0_i32_1 = arith.constant 0 : i32
    return %c0_i32, %c0_i32_0 : i32, i32
  }
  func.func @transform_2(%arg0: i32) -> (i32, i32) {
    %c0_i32 = arith.constant 0 : i32
    %c0_i32_0 = arith.constant 0 : i32
    return %c0_i32, %arg0 : i32, i32
  }
}

</mosaic_0001>

<llo_original>
// kernel: net_forward.1
$region0: #{net_forward.1}
  #allocation0 [shape = 'u32[]', space=smem, size = 0x4, offset = 0x4, fixed_abs, tag = 'smem constant byte address 0x4 - core index']
  #allocation1 [shape = 'u32[144,128]{1,0:T(1,128)}', space=vmem, size = 0x12000, scoped, tag = 'internal scratch']
  %s0 = inlined_call_operand.vmem [shape: f32[1,8], index: 0, kind: input, shape index: {}]
  %s1 = inlined_call_operand.vmem [shape: f32[51,4], index: 1, kind: input, shape index: {}]
  %s2 = inlined_call_operand.hbm [shape: f32[2,8], index: 2, kind: output, shape index: {}]
  %s3 = sld [smem:[#allocation0]]
  $region18: #{net_forward.1} parent=0
    _
  %s5 = ssub.s32 1, %s3
  %s6 = scalar_select 0, %s5, %s3
  $region1: #{net_forward.1} parent=0
    #allocation2 [shape = 'u8[1024]{0}', space=vmem, size = 0x400, scoped, tag = 'output window, operand 0, single buffered']
    #allocation3 [shape = 's32[1]{0}', space=sflag, size = 0x4, scoped, tag = 'scoped memory for net_forward.1']
    %7 = vsyncpa [#allocation3], 0
    // Predicated region
    $region2: #{net_forward.1} parent=1 // pred_check
      _
    $region3: #{net_forward.1} parent=1 // pred_check_branch
      %9 = sbr.rel (0) target = $region5
    $region4: #{net_forward.1} parent=1 // pred_region
      _
    $region5: #{net_forward.1} parent=1 // pred_fallthru
      _
    // Predicated region
    $region6: #{net_forward.1} parent=1 // pred_check
      _
    $region7: #{net_forward.1} parent=1 // pred_check_branch
      %11 = sbr.rel (0) target = $region9
    $region8: #{net_forward.1} parent=1 // pred_region
      _
    $region9: #{net_forward.1} parent=1 // pred_fallthru
      _
    %v12 = vld [vmem:[%s0] sm:$0x1]
    %v13 = vld [vmem:[%s1] sm:$0xff]
    %v14 = vld [vmem:[%s1 + $0x8] sm:$0xff]
    %v15 = vld [vmem:[%s1 + $0x10] sm:$0xff]
    %v16 = vld [vmem:[%s1 + $0x18] sm:$0xff]
    %v17 = vld [vmem:[%s1 + $0x20] sm:$0xff]
    %v18 = vld [vmem:[%s1 + $0x28] sm:$0xff]
    %v19 = vld [vmem:[%s1 + $0x30] sm:$0x7]
    %v21 = vlaneseq
    %v22 = vshrl.u32 %v21, 7
    %v23 = vsub.s32 0, %v22
    %v24 = vrot.slane %v12, %v23
    %27 = vset.pattern.permute.xlu0 0
    %28 = vperm.xlu0 %27, %v13
    %v29 = vpop.permute.xlu0 %28
    %32 = vset.pattern.permute.xlu0 0
    %33 = vperm.xlu0 %32, %v14
    %v34 = vpop.permute.xlu0 %33
    %37 = vset.pattern.permute.xlu0 0
    %38 = vperm.xlu0 %37, %v15
    %v39 = vpop.permute.xlu0 %38
    %42 = vset.pattern.permute.xlu0 0
    %43 = vperm.xlu0 %42, %v16
    %v44 = vpop.permute.xlu0 %43
    %47 = vset.pattern.permute.xlu0 0
    %48 = vperm.xlu0 %47, %v17
    %v49 = vpop.permute.xlu0 %48
    %52 = vset.pattern.permute.xlu0 0
    %53 = vperm.xlu0 %52, %v18
    %v54 = vpop.permute.xlu0 %53
    %57 = vset.pattern.permute.xlu0 0
    %58 = vperm.xlu0 %57, %v19
    %v59 = vpop.permute.xlu0 %58
    %v61 = vmul.f32 %v24, %v29
    %v62 = vmul.f32 %v24, %v34
    %v63 = vmul.f32 %v24, %v39
    %v64 = vmul.f32 %v24, %v44
    %v65 = vmul.f32 %v24, %v49
    %v66 = vmul.f32 %v24, %v54
    %v67 = vmul.f32 %v24, %v59
    %68 = vset.pattern.permute.xlu0 1
    %69 = vperm.xlu0 %68, %v13
    %v70 = vpop.permute.xlu0 %69
    %72 = vset.pattern.permute.xlu0 1
    %73 = vperm.xlu0 %72, %v14
    %v74 = vpop.permute.xlu0 %73
    %76 = vset.pattern.permute.xlu0 1
    %77 = vperm.xlu0 %76, %v15
    %v78 = vpop.permute.xlu0 %77
    %80 = vset.pattern.permute.xlu0 1
    %81 = vperm.xlu0 %80, %v16
    %v82 = vpop.permute.xlu0 %81
    %84 = vset.pattern.permute.xlu0 1
    %85 = vperm.xlu0 %84, %v17
    %v86 = vpop.permute.xlu0 %85
    %88 = vset.pattern.permute.xlu0 1
    %89 = vperm.xlu0 %88, %v18
    %v90 = vpop.permute.xlu0 %89
    %92 = vset.pattern.permute.xlu0 1
    %93 = vperm.xlu0 %92, %v19
    %v94 = vpop.permute.xlu0 %93
    %v96 = vadd.f32 %v61, %v70
    %v97 = vadd.f32 %v62, %v74
    %v98 = vadd.f32 %v63, %v78
    %v99 = vadd.f32 %v64, %v82
    %v100 = vadd.f32 %v65, %v86
    %v101 = vadd.f32 %v66, %v90
    %v102 = vadd.f32 %v67, %v94
    %v103 = vmax.f32 %v96, 0.0
    %v104 = vmax.f32 %v97, 0.0
    %v105 = vmax.f32 %v98, 0.0
    %v106 = vmax.f32 %v99, 0.0
    %v107 = vmax.f32 %v100, 0.0
    %v108 = vmax.f32 %v101, 0.0
    %v109 = vmax.f32 %v102, 0.0
    %110 = vset.pattern.permute.xlu0 2
    %111 = vperm.xlu0 %110, %v13
    %v112 = vpop.permute.xlu0 %111
    %114 = vset.pattern.permute.xlu0 2
    %115 = vperm.xlu0 %114, %v14
    %v116 = vpop.permute.xlu0 %115
    %118 = vset.pattern.permute.xlu0 2
    %119 = vperm.xlu0 %118, %v15
    %v120 = vpop.permute.xlu0 %119
    %122 = vset.pattern.permute.xlu0 2
    %123 = vperm.xlu0 %122, %v16
    %v124 = vpop.permute.xlu0 %123
    %126 = vset.pattern.permute.xlu0 2
    %127 = vperm.xlu0 %126, %v17
    %v128 = vpop.permute.xlu0 %127
    %130 = vset.pattern.permute.xlu0 2
    %131 = vperm.xlu0 %130, %v18
    %v132 = vpop.permute.xlu0 %131
    %134 = vset.pattern.permute.xlu0 2
    %135 = vperm.xlu0 %134, %v19
    %v136 = vpop.permute.xlu0 %135
    %v138 = vmul.f32 %v103, %v112
    %v139 = vmul.f32 %v104, %v116
    %v140 = vmul.f32 %v105, %v120
    %v141 = vmul.f32 %v106, %v124
    %v142 = vmul.f32 %v107, %v128
    %v143 = vmul.f32 %v108, %v132
    %v144 = vmul.f32 %v109, %v136
    %vm145 = vcmask 64512
    %v146 = vsel %vm145, %v138, 0.0
    %v147 = vsel %vm145, %v139, 0.0
    %v148 = vadd.f32 %v146, %v147
    %v149 = vsel %vm145, %v140, 0.0
    %v150 = vadd.f32 %v148, %v149
    %v151 = vsel %vm145, %v141, 0.0
    %v152 = vadd.f32 %v150, %v151
    %v153 = vsel %vm145, %v142, 0.0
    %v154 = vadd.f32 %v152, %v153
    %v155 = vsel %vm145, %v143, 0.0
    %v156 = vadd.f32 %v154, %v155
    %vm157 = vcmask 59392
    %v158 = vsel %vm157, %v144, 0.0
    %v159 = vadd.f32 %v156, %v158
    %v160 = vrot.slane %v159, 4
    %v161 = vadd.f32 %v159, %v160
    %v162 = vrot.slane %v161, 2
    %v163 = vadd.f32 %v161, %v162
    %v164 = vrot.slane %v163, 1
    %v165 = vadd.f32 %v163, %v164
    %166 = vset.pattern.permute.xlu0 3
    %167 = vperm.xlu0 %166, %v13
    %v168 = vpop.permute.xlu0 %167
    %170 = vset.pattern.permute.xlu0 3
    %171 = vperm.xlu0 %170, %v14
    %v172 = vpop.permute.xlu0 %171
    %174 = vset.pattern.permute.xlu0 3
    %175 = vperm.xlu0 %174, %v15
    %v176 = vpop.permute.xlu0 %175
    %178 = vset.pattern.permute.xlu0 3
    %179 = vperm.xlu0 %178, %v16
    %v180 = vpop.permute.xlu0 %179
    %182 = vset.pattern.permute.xlu0 3
    %183 = vperm.xlu0 %182, %v17
    %v184 = vpop.permute.xlu0 %183
    %186 = vset.pattern.permute.xlu0 3
    %187 = vperm.xlu0 %186, %v18
    %v188 = vpop.permute.xlu0 %187
    %190 = vset.pattern.permute.xlu0 3
    %191 = vperm.xlu0 %190, %v19
    %v192 = vpop.permute.xlu0 %191
    %v194 = vmul.f32 %v103, %v168
    %v195 = vmul.f32 %v104, %v172
    %v196 = vmul.f32 %v105, %v176
    %v197 = vmul.f32 %v106, %v180
    %v198 = vmul.f32 %v107, %v184
    %v199 = vmul.f32 %v108, %v188
    %v200 = vmul.f32 %v109, %v192
    %v201 = vsel %vm145, %v194, 0.0
    %v202 = vsel %vm145, %v195, 0.0
    %v203 = vadd.f32 %v201, %v202
    %v204 = vsel %vm145, %v196, 0.0
    %v205 = vadd.f32 %v203, %v204
    %v206 = vsel %vm145, %v197, 0.0
    %v207 = vadd.f32 %v205, %v206
    %v208 = vsel %vm145, %v198, 0.0
    %v209 = vadd.f32 %v207, %v208
    %v210 = vsel %vm145, %v199, 0.0
    %v211 = vadd.f32 %v209, %v210
    %v212 = vsel %vm157, %v200, 0.0
    %v213 = vadd.f32 %v211, %v212
    %v214 = vrot.slane %v213, 4
    %v215 = vadd.f32 %v213, %v214
    %v216 = vrot.slane %v215, 2
    %v217 = vadd.f32 %v215, %v216
    %v218 = vrot.slane %v217, 1
    %v219 = vadd.f32 %v217, %v218
    %vm220 = vcmask 57344
    %221 = vst.msk [vmem:[#allocation2] sm:$0x1] %vm220, %v165
    %222 = vst.msk [vmem:[#allocation2 + $0x1] sm:$0x1] %vm220, %v219
    // Predicated region
    $region10: #{net_forward.1} parent=1 // pred_check
      _
    $region11: #{net_forward.1} parent=1 // pred_check_branch
      %224 = sbr.rel (0) target = $region13
    $region12: #{net_forward.1} parent=1 // pred_region
      %s226 = ssub.s32 32, 32
      %227 = vsyncadd [#allocation3], %s226
      %s229 = sshll.u32 [#allocation2], 4
      %s230 = int_to_ptr.vmem [resolvable:$true] %s229
      %232 = dma.vmem_to_hbm [thread:$0]  %s230, 32, %s2, [#allocation3]
    $region13: #{net_forward.1} parent=1 // pred_fallthru
      _
    // Predicated region
    $region14: #{net_forward.1} parent=1 // pred_check
      _
    $region15: #{net_forward.1} parent=1 // pred_check_branch
      %234 = sbr.rel (0) target = $region17
    $region16: #{net_forward.1} parent=1 // pred_region
      %235 = dma.done [#allocation3], 32
    $region17: #{net_forward.1} parent=1 // pred_fallthru
      _
    %236 = vsyncpa [#allocation3], 1

</llo_original>
